<compile_context>
chip_gen: v7x
topology: tpu7x:2x2x1
jax: 0.10.0
libtpu: 0.0.40
codegen_flags: <defaults>
</compile_context>

<pallas_src>
import functools
import math

import jax
import jax.numpy as jnp
from jax.experimental import pallas as pl
from jax.experimental.pallas import tpu as pltpu

_EPS = 1e-5  # hardcoded in AttentionPrior.__init__


def get_slopes(n):
    def get_slopes_power_of_2(n):
        start = 2 ** (-2 ** (-(math.log2(n) - 3)))
        ratio = start
        return [start * ratio ** i for i in range(n)]

    if math.log2(n).is_integer():
        return get_slopes_power_of_2(n)
    closest_power_of_2 = 2 ** math.floor(math.log2(n))
    return (get_slopes_power_of_2(closest_power_of_2)
            + get_slopes(2 * closest_power_of_2)[0::2][: n - closest_power_of_2])


def _round_up(x, m):
    return -(-x // m) * m


def _pick_tiles(n_heads, seq_len, kv_len, out_bytes,
                block_budget=4 << 20, target_block=1 << 20, max_tq=512):
    """Choose (kv_pad, tq, s_pad, hb) for the generator grid.

    kv_pad: lane-dense KV width (multiple of 128) -> unmasked stores.
    tq:     q rows per block (multiple of 8 for f32 / 16 for bf16), capped by
            the block-byte budget and by max_tq so long sequences keep >= 2
            q-tiles for megacore sharding.
    hb:     heads per block (divisor of n_heads), grown until each grid step
            writes ~target_block bytes (helps tiny decode-style shapes).
    """
    kv_pad = _round_up(max(kv_len, 1), 128)
    row_align = 16 if out_bytes == 2 else 8
    rows_budget = max(row_align,
                      (block_budget // (kv_pad * out_bytes)) // row_align * row_align)
    tq = min(rows_budget, _round_up(seq_len, row_align), max_tq)
    s_pad = _round_up(seq_len, tq)

    per_head = tq * kv_pad * out_bytes
    hb_cap = max(1, min(n_heads, block_budget // per_head))
    hb = 1
    for d in range(1, n_heads + 1):
        if n_heads % d != 0 or d > hb_cap:
            continue
        hb = d
        if d * per_head >= target_block:
            break
    return kv_pad, tq, s_pad, hb


def _attention_prior_kernel(shape_ref, scale_exp_ref, loc_eff_ref, o_ref, dist_ref, *,
                            hb, tq, kv_pad, start_pos):
    """One (q-tile, head-block): o[j,:,:] = -(|(dist - lce_h)*scl_h| + eps) ** shape_h."""
    qi = pl.program_id(0)
    hbi = pl.program_id(1)

    # dist depends only on the q-tile, not on the head: compute it once per
    # q-tile (head axis is the inner, "arbitrary" grid axis) and reuse it for
    # every head block at this qi.
    @pl.when(hbi == 0)
    def _():
        row = jax.lax.broadcasted_iota(jnp.int32, (tq, kv_pad), 0)
        col = jax.lax.broadcasted_iota(jnp.int32, (tq, kv_pad), 1)
        off = (qi * tq + start_pos).astype(jnp.float32)
        # dist[r, c] = c - (r + qi*tq + start_pos)
        dist_ref[...] = (col - row).astype(jnp.float32) - off

    dist = dist_ref[...]
    for j in range(hb):  # static unroll over the heads in this block
        h = hbi * hb + j
        shp = shape_ref[h]        # per-head SMEM scalars (transcendentals hoisted)
        scl = scale_exp_ref[h]    # exp(scale)
        lce = loc_eff_ref[h]      # exp(loc) - exp(-loc)
        z = (dist - lce) * scl
        base = jnp.abs(z) + _EPS  # > 0, so pow == exp(shape * log(base))
        o_ref[j, :, :] = (-jnp.exp(shp * jnp.log(base))).astype(o_ref.dtype)


@functools.partial(jax.jit, static_argnames=("seq_len", "start_pos", "out_dtype"))
def attention_prior_pallas(shape, scale_log, loc, *, seq_len, start_pos=0,
                           out_dtype=jnp.float32):
    """shape/scale_log/loc: (n_heads,) f32. Returns (1, H, seq_len, seq_len+start_pos)."""
    n_heads = shape.shape[0]
    kv_len = seq_len + start_pos
    out_bytes = jnp.dtype(out_dtype).itemsize
    kv_pad, tq, s_pad, hb = _pick_tiles(n_heads, seq_len, kv_len, out_bytes)
    n_q_tiles = s_pad // tq
    n_h_blocks = n_heads // hb

    # Hoist per-head transcendental constants out of the kernel (exact rewrite:
    # they do not depend on the (q, k) grid).
    shape_f = shape.astype(jnp.float32)
    scale_exp = jnp.exp(scale_log.astype(jnp.float32))
    loc_f = loc.astype(jnp.float32)
    loc_eff = jnp.exp(loc_f) - jnp.exp(-loc_f)

    kernel = functools.partial(_attention_prior_kernel,
                               hb=hb, tq=tq, kv_pad=kv_pad, start_pos=start_pos)

    block_bytes = hb * tq * kv_pad * out_bytes
    scratch_bytes = tq * kv_pad * 4
    vmem_limit = min(64 << 20,
                     max(16 << 20, 2 * block_bytes + scratch_bytes + (8 << 20)))

    n_elems = n_heads * s_pad * kv_pad
    out3d = pl.pallas_call(
        kernel,
        out_shape=jax.ShapeDtypeStruct((n_heads, s_pad, kv_pad), out_dtype),
        grid_spec=pltpu.PrefetchScalarGridSpec(
            num_scalar_prefetch=0,
            grid=(n_q_tiles, n_h_blocks),
            in_specs=[
                pl.BlockSpec(memory_space=pltpu.MemorySpace.SMEM),  # shape    (H,)
                pl.BlockSpec(memory_space=pltpu.MemorySpace.SMEM),  # exp(scale) (H,)
                pl.BlockSpec(memory_space=pltpu.MemorySpace.SMEM),  # loc_eff  (H,)
            ],
            out_specs=pl.BlockSpec((hb, tq, kv_pad), lambda qi, hbi: (hbi, qi, 0)),
            scratch_shapes=[pltpu.VMEM((tq, kv_pad), jnp.float32)],  # dist block
        ),
        compiler_params=pltpu.CompilerParams(
            dimension_semantics=("parallel", "arbitrary"),
            vmem_limit_bytes=int(vmem_limit)),
        cost_estimate=pl.CostEstimate(
            flops=7 * n_elems,
            transcendentals=2 * n_elems,
            bytes_accessed=out_bytes * n_elems + 12 * n_heads),
    )(shape_f, scale_exp, loc_eff)

    # Slice off lane / row padding (no-op when already aligned).
    out3d = out3d[:, :seq_len, :kv_len]
    return out3d.reshape(1, n_heads, seq_len, kv_len)


def attention_prior_ref(shape, scale_log, loc, seq_len, start_pos=0):
    """Pure-JAX reference matching the PyTorch forward exactly."""
    q_pos = jnp.arange(seq_len, dtype=jnp.float32) + start_pos
    k_pos = jnp.arange(seq_len + start_pos, dtype=jnp.float32)
    dist = (k_pos[None, :] - q_pos[:, None]).reshape(1, 1, seq_len, seq_len + start_pos)
    shp = shape.reshape(1, -1, 1, 1)
    scl = scale_log.reshape(1, -1, 1, 1)
    lc = loc.reshape(1, -1, 1, 1)
    loc_eff = jnp.exp(lc) - jnp.exp(-lc)
    z = (dist - loc_eff) * jnp.exp(scl)
    return -(jnp.abs(z) + _EPS) ** shp


if __name__ == "__main__":
    key = jax.random.PRNGKey(0)

    # Small shapes consistent with the module.
    n_heads = 8
    seq_len = 16

    # Parameters exactly as AttentionPrior.__init__ would build them
    # (scale_init='slope', shape_init='linear', loc exercised with small values).
    slopes = jnp.asarray(get_slopes(n_heads), dtype=jnp.float32)
    scale_log = jnp.log(slopes)                                        # stored param = log(scale)
    shape = jnp.linspace(0.0, 1.0, n_heads, dtype=jnp.float32)         # shape_init='linear'
    loc = 0.1 * jax.random.normal(key, (n_heads,), dtype=jnp.float32)  # nonzero loc path

    # Prefill-style call (start_pos = 0), f32 output matches the module exactly.
    out = attention_prior_pallas(shape, scale_log, loc, seq_len=seq_len, start_pos=0)
    out = jax.block_until_ready(out)
    ref = attention_prior_ref(shape, scale_log, loc, seq_len, 0)
    assert out.shape == (1, n_heads, seq_len, seq_len)
    assert out.dtype == jnp.float32
    assert jnp.allclose(out, ref, atol=1e-4, rtol=1e-5), "mismatch vs reference (start_pos=0)"

    # Decode-style call with a KV prefix (start_pos > 0, ragged KV -> padded lanes).
    out2 = attention_prior_pallas(shape, scale_log, loc, seq_len=seq_len, start_pos=4)
    out2 = jax.block_until_ready(out2)
    ref2 = attention_prior_ref(shape, scale_log, loc, seq_len, 4)
    assert out2.shape == (1, n_heads, seq_len, seq_len + 4)
    assert jnp.allclose(out2, ref2, atol=1e-4, rtol=1e-5), "mismatch vs reference (start_pos=4)"

    # Optional bf16 output path (halves HBM-write bytes; use when the consumer accepts bf16).
    out3 = attention_prior_pallas(shape, scale_log, loc, seq_len=seq_len, start_pos=0,
                                  out_dtype=jnp.bfloat16)
    out3 = jax.block_until_ready(out3)
    assert out3.dtype == jnp.bfloat16
    assert jnp.allclose(out3.astype(jnp.float32), ref, atol=5e-2, rtol=5e-2), \
        "mismatch vs reference (bf16 output)"

    print("KERNEL_OK")
</pallas_src>

<mosaic_0001>
module attributes {stable_mosaic.version = 11 : i64} {
  func.func @_attention_prior_kernel(%arg0: i32, %arg1: i32, %arg2: memref<8xf32, #tpu.memory_space<smem>>, %arg3: memref<8xf32, #tpu.memory_space<smem>>, %arg4: memref<8xf32, #tpu.memory_space<smem>>, %arg5: memref<8x16x128xf32, #tpu.memory_space<vmem>>, %arg6: memref<16x128xf32, #tpu.memory_space<vmem>>) attributes {dimension_semantics = [#tpu.dimension_semantics<parallel>, #tpu.dimension_semantics<arbitrary>], iteration_bounds = array<i64: 1, 1>, scalar_prefetch = 0 : i64, scratch_operands = 1 : i64, tpu.core_type = #tpu.core_type<tc>, window_params = [{transform_indices = @transform_0, window_bounds = array<i64: 8>}, {transform_indices = @transform_1, window_bounds = array<i64: 8>}, {transform_indices = @transform_2, window_bounds = array<i64: 8>}, {transform_indices = @transform_3, window_bounds = array<i64: 8, 16, 128>}]} {
    %c0_i32 = arith.constant 0 : i32
    %0 = arith.cmpi eq, %arg1, %c0_i32 : i32
    %1 = arith.extui %0 : i1 to i32
    %c0_i32_0 = arith.constant 0 : i32
    %2 = arith.cmpi ne, %1, %c0_i32_0 : i32
    scf.if %2 {
      %196 = tpu.iota {dimensions = array<i32: 0>} : vector<16x128xi32>
      %197 = tpu.iota {dimensions = array<i32: 1>} : vector<16x128xi32>
      %c16_i32 = arith.constant 16 : i32
      %198 = arith.muli %arg0, %c16_i32 : i32
      %c0_i32_42 = arith.constant 0 : i32
      %199 = arith.addi %198, %c0_i32_42 : i32
      %200 = arith.sitofp %199 : i32 to f32
      %201 = arith.subi %197, %196 : vector<16x128xi32>
      %202 = arith.sitofp %201 : vector<16x128xi32> to vector<16x128xf32>
      %203 = vector.broadcast %200 : f32 to vector<16x128xf32>
      %204 = arith.subf %202, %203 : vector<16x128xf32>
      %c0_43 = arith.constant 0 : index
      %c0_44 = arith.constant 0 : index
      %205 = vector.load %arg6[%c0_43, %c0_44] : memref<16x128xf32, #tpu.memory_space<vmem>>, vector<16x128xf32>
      tpu.vector_store %arg6[%c0_43, %c0_44], %204 {strides = array<i32>} : memref<16x128xf32, #tpu.memory_space<vmem>>, vector<16x128xf32>,
    } else {
    }
    %c0 = arith.constant 0 : index
    %c0_1 = arith.constant 0 : index
    %3 = vector.load %arg6[%c0, %c0_1] : memref<16x128xf32, #tpu.memory_space<vmem>>, vector<16x128xf32>
    %c8_i32 = arith.constant 8 : i32
    %4 = arith.muli %arg1, %c8_i32 : i32
    %c0_i32_2 = arith.constant 0 : i32
    %5 = arith.addi %4, %c0_i32_2 : i32
    %6 = arith.index_cast %5 : i32 to index
    %7 = memref.load %arg2[%6] : memref<8xf32, #tpu.memory_space<smem>>
    %8 = arith.index_cast %5 : i32 to index
    %9 = memref.load %arg3[%8] : memref<8xf32, #tpu.memory_space<smem>>
    %10 = arith.index_cast %5 : i32 to index
    %11 = memref.load %arg4[%10] : memref<8xf32, #tpu.memory_space<smem>>
    %12 = vector.broadcast %11 : f32 to vector<16x128xf32>
    %13 = arith.subf %3, %12 : vector<16x128xf32>
    %14 = vector.broadcast %9 : f32 to vector<16x128xf32>
    %15 = arith.mulf %13, %14 : vector<16x128xf32>
    %16 = math.absf %15 : vector<16x128xf32>
    %cst = arith.constant 9.99999974E-6 : f32
    %17 = vector.broadcast %cst : f32 to vector<16x128xf32>
    %18 = arith.addf %16, %17 : vector<16x128xf32>
    %19 = math.log %18 : vector<16x128xf32>
    %20 = vector.broadcast %7 : f32 to vector<16x128xf32>
    %21 = arith.mulf %20, %19 : vector<16x128xf32>
    %22 = math.exp %21 : vector<16x128xf32>
    %cst_3 = arith.constant 0.000000e+00 : f32
    %23 = vector.broadcast %cst_3 : f32 to vector<16x128xf32>
    %24 = arith.subf %23, %22 : vector<16x128xf32>
    %c0_4 = arith.constant 0 : index
    %c0_5 = arith.constant 0 : index
    %c0_6 = arith.constant 0 : index
    %25 = vector.load %arg5[%c0_4, %c0_5, %c0_6] : memref<8x16x128xf32, #tpu.memory_space<vmem>>, vector<1x16x128xf32>
    %26 = vector.shape_cast %25 : vector<1x16x128xf32> to vector<16x128xf32>
    %27 = vector.shape_cast %24 : vector<16x128xf32> to vector<1x16x128xf32>
    tpu.vector_store %arg5[%c0_4, %c0_5, %c0_6], %27 {strides = array<i32>} : memref<8x16x128xf32, #tpu.memory_space<vmem>>, vector<1x16x128xf32>,
    %c8_i32_7 = arith.constant 8 : i32
    %28 = arith.muli %arg1, %c8_i32_7 : i32
    %c1_i32 = arith.constant 1 : i32
    %29 = arith.addi %28, %c1_i32 : i32
    %30 = arith.index_cast %29 : i32 to index
    %31 = memref.load %arg2[%30] : memref<8xf32, #tpu.memory_space<smem>>
    %32 = arith.index_cast %29 : i32 to index
    %33 = memref.load %arg3[%32] : memref<8xf32, #tpu.memory_space<smem>>
    %34 = arith.index_cast %29 : i32 to index
    %35 = memref.load %arg4[%34] : memref<8xf32, #tpu.memory_space<smem>>
    %36 = vector.broadcast %35 : f32 to vector<16x128xf32>
    %37 = arith.subf %3, %36 : vector<16x128xf32>
    %38 = vector.broadcast %33 : f32 to vector<16x128xf32>
    %39 = arith.mulf %37, %38 : vector<16x128xf32>
    %40 = math.absf %39 : vector<16x128xf32>
    %cst_8 = arith.constant 9.99999974E-6 : f32
    %41 = vector.broadcast %cst_8 : f32 to vector<16x128xf32>
    %42 = arith.addf %40, %41 : vector<16x128xf32>
    %43 = math.log %42 : vector<16x128xf32>
    %44 = vector.broadcast %31 : f32 to vector<16x128xf32>
    %45 = arith.mulf %44, %43 : vector<16x128xf32>
    %46 = math.exp %45 : vector<16x128xf32>
    %cst_9 = arith.constant 0.000000e+00 : f32
    %47 = vector.broadcast %cst_9 : f32 to vector<16x128xf32>
    %48 = arith.subf %47, %46 : vector<16x128xf32>
    %c1 = arith.constant 1 : index
    %c0_10 = arith.constant 0 : index
    %c0_11 = arith.constant 0 : index
    %49 = vector.load %arg5[%c1, %c0_10, %c0_11] : memref<8x16x128xf32, #tpu.memory_space<vmem>>, vector<1x16x128xf32>
    %50 = vector.shape_cast %49 : vector<1x16x128xf32> to vector<16x128xf32>
    %51 = vector.shape_cast %48 : vector<16x128xf32> to vector<1x16x128xf32>
    tpu.vector_store %arg5[%c1, %c0_10, %c0_11], %51 {strides = array<i32>} : memref<8x16x128xf32, #tpu.memory_space<vmem>>, vector<1x16x128xf32>,
    %c8_i32_12 = arith.constant 8 : i32
    %52 = arith.muli %arg1, %c8_i32_12 : i32
    %c2_i32 = arith.constant 2 : i32
    %53 = arith.addi %52, %c2_i32 : i32
    %54 = arith.index_cast %53 : i32 to index
    %55 = memref.load %arg2[%54] : memref<8xf32, #tpu.memory_space<smem>>
    %56 = arith.index_cast %53 : i32 to index
    %57 = memref.load %arg3[%56] : memref<8xf32, #tpu.memory_space<smem>>
    %58 = arith.index_cast %53 : i32 to index
    %59 = memref.load %arg4[%58] : memref<8xf32, #tpu.memory_space<smem>>
    %60 = vector.broadcast %59 : f32 to vector<16x128xf32>
    %61 = arith.subf %3, %60 : vector<16x128xf32>
    %62 = vector.broadcast %57 : f32 to vector<16x128xf32>
    %63 = arith.mulf %61, %62 : vector<16x128xf32>
    %64 = math.absf %63 : vector<16x128xf32>
    %cst_13 = arith.constant 9.99999974E-6 : f32
    %65 = vector.broadcast %cst_13 : f32 to vector<16x128xf32>
    %66 = arith.addf %64, %65 : vector<16x128xf32>
    %67 = math.log %66 : vector<16x128xf32>
    %68 = vector.broadcast %55 : f32 to vector<16x128xf32>
    %69 = arith.mulf %68, %67 : vector<16x128xf32>
    %70 = math.exp %69 : vector<16x128xf32>
    %cst_14 = arith.constant 0.000000e+00 : f32
    %71 = vector.broadcast %cst_14 : f32 to vector<16x128xf32>
    %72 = arith.subf %71, %70 : vector<16x128xf32>
    %c2 = arith.constant 2 : index
    %c0_15 = arith.constant 0 : index
    %c0_16 = arith.constant 0 : index
    %73 = vector.load %arg5[%c2, %c0_15, %c0_16] : memref<8x16x128xf32, #tpu.memory_space<vmem>>, vector<1x16x128xf32>
    %74 = vector.shape_cast %73 : vector<1x16x128xf32> to vector<16x128xf32>
    %75 = vector.shape_cast %72 : vector<16x128xf32> to vector<1x16x128xf32>
    tpu.vector_store %arg5[%c2, %c0_15, %c0_16], %75 {strides = array<i32>} : memref<8x16x128xf32, #tpu.memory_space<vmem>>, vector<1x16x128xf32>,
    %c8_i32_17 = arith.constant 8 : i32
    %76 = arith.muli %arg1, %c8_i32_17 : i32
    %c3_i32 = arith.constant 3 : i32
    %77 = arith.addi %76, %c3_i32 : i32
    %78 = arith.index_cast %77 : i32 to index
    %79 = memref.load %arg2[%78] : memref<8xf32, #tpu.memory_space<smem>>
    %80 = arith.index_cast %77 : i32 to index
    %81 = memref.load %arg3[%80] : memref<8xf32, #tpu.memory_space<smem>>
    %82 = arith.index_cast %77 : i32 to index
    %83 = memref.load %arg4[%82] : memref<8xf32, #tpu.memory_space<smem>>
    %84 = vector.broadcast %83 : f32 to vector<16x128xf32>
    %85 = arith.subf %3, %84 : vector<16x128xf32>
    %86 = vector.broadcast %81 : f32 to vector<16x128xf32>
    %87 = arith.mulf %85, %86 : vector<16x128xf32>
    %88 = math.absf %87 : vector<16x128xf32>
    %cst_18 = arith.constant 9.99999974E-6 : f32
    %89 = vector.broadcast %cst_18 : f32 to vector<16x128xf32>
    %90 = arith.addf %88, %89 : vector<16x128xf32>
    %91 = math.log %90 : vector<16x128xf32>
    %92 = vector.broadcast %79 : f32 to vector<16x128xf32>
    %93 = arith.mulf %92, %91 : vector<16x128xf32>
    %94 = math.exp %93 : vector<16x128xf32>
    %cst_19 = arith.constant 0.000000e+00 : f32
    %95 = vector.broadcast %cst_19 : f32 to vector<16x128xf32>
    %96 = arith.subf %95, %94 : vector<16x128xf32>
    %c3 = arith.constant 3 : index
    %c0_20 = arith.constant 0 : index
    %c0_21 = arith.constant 0 : index
    %97 = vector.load %arg5[%c3, %c0_20, %c0_21] : memref<8x16x128xf32, #tpu.memory_space<vmem>>, vector<1x16x128xf32>
    %98 = vector.shape_cast %97 : vector<1x16x128xf32> to vector<16x128xf32>
    %99 = vector.shape_cast %96 : vector<16x128xf32> to vector<1x16x128xf32>
    tpu.vector_store %arg5[%c3, %c0_20, %c0_21], %99 {strides = array<i32>} : memref<8x16x128xf32, #tpu.memory_space<vmem>>, vector<1x16x128xf32>,
    %c8_i32_22 = arith.constant 8 : i32
    %100 = arith.muli %arg1, %c8_i32_22 : i32
    %c4_i32 = arith.constant 4 : i32
    %101 = arith.addi %100, %c4_i32 : i32
    %102 = arith.index_cast %101 : i32 to index
    %103 = memref.load %arg2[%102] : memref<8xf32, #tpu.memory_space<smem>>
    %104 = arith.index_cast %101 : i32 to index
    %105 = memref.load %arg3[%104] : memref<8xf32, #tpu.memory_space<smem>>
    %106 = arith.index_cast %101 : i32 to index
    %107 = memref.load %arg4[%106] : memref<8xf32, #tpu.memory_space<smem>>
    %108 = vector.broadcast %107 : f32 to vector<16x128xf32>
    %109 = arith.subf %3, %108 : vector<16x128xf32>
    %110 = vector.broadcast %105 : f32 to vector<16x128xf32>
    %111 = arith.mulf %109, %110 : vector<16x128xf32>
    %112 = math.absf %111 : vector<16x128xf32>
    %cst_23 = arith.constant 9.99999974E-6 : f32
    %113 = vector.broadcast %cst_23 : f32 to vector<16x128xf32>
    %114 = arith.addf %112, %113 : vector<16x128xf32>
    %115 = math.log %114 : vector<16x128xf32>
    %116 = vector.broadcast %103 : f32 to vector<16x128xf32>
    %117 = arith.mulf %116, %115 : vector<16x128xf32>
    %118 = math.exp %117 : vector<16x128xf32>
    %cst_24 = arith.constant 0.000000e+00 : f32
    %119 = vector.broadcast %cst_24 : f32 to vector<16x128xf32>
    %120 = arith.subf %119, %118 : vector<16x128xf32>
    %c4 = arith.constant 4 : index
    %c0_25 = arith.constant 0 : index
    %c0_26 = arith.constant 0 : index
    %121 = vector.load %arg5[%c4, %c0_25, %c0_26] : memref<8x16x128xf32, #tpu.memory_space<vmem>>, vector<1x16x128xf32>
    %122 = vector.shape_cast %121 : vector<1x16x128xf32> to vector<16x128xf32>
    %123 = vector.shape_cast %120 : vector<16x128xf32> to vector<1x16x128xf32>
    tpu.vector_store %arg5[%c4, %c0_25, %c0_26], %123 {strides = array<i32>} : memref<8x16x128xf32, #tpu.memory_space<vmem>>, vector<1x16x128xf32>,
    %c8_i32_27 = arith.constant 8 : i32
    %124 = arith.muli %arg1, %c8_i32_27 : i32
    %c5_i32 = arith.constant 5 : i32
    %125 = arith.addi %124, %c5_i32 : i32
    %126 = arith.index_cast %125 : i32 to index
    %127 = memref.load %arg2[%126] : memref<8xf32, #tpu.memory_space<smem>>
    %128 = arith.index_cast %125 : i32 to index
    %129 = memref.load %arg3[%128] : memref<8xf32, #tpu.memory_space<smem>>
    %130 = arith.index_cast %125 : i32 to index
    %131 = memref.load %arg4[%130] : memref<8xf32, #tpu.memory_space<smem>>
    %132 = vector.broadcast %131 : f32 to vector<16x128xf32>
    %133 = arith.subf %3, %132 : vector<16x128xf32>
    %134 = vector.broadcast %129 : f32 to vector<16x128xf32>
    %135 = arith.mulf %133, %134 : vector<16x128xf32>
    %136 = math.absf %135 : vector<16x128xf32>
    %cst_28 = arith.constant 9.99999974E-6 : f32
    %137 = vector.broadcast %cst_28 : f32 to vector<16x128xf32>
    %138 = arith.addf %136, %137 : vector<16x128xf32>
    %139 = math.log %138 : vector<16x128xf32>
    %140 = vector.broadcast %127 : f32 to vector<16x128xf32>
    %141 = arith.mulf %140, %139 : vector<16x128xf32>
    %142 = math.exp %141 : vector<16x128xf32>
    %cst_29 = arith.constant 0.000000e+00 : f32
    %143 = vector.broadcast %cst_29 : f32 to vector<16x128xf32>
    %144 = arith.subf %143, %142 : vector<16x128xf32>
    %c5 = arith.constant 5 : index
    %c0_30 = arith.constant 0 : index
    %c0_31 = arith.constant 0 : index
    %145 = vector.load %arg5[%c5, %c0_30, %c0_31] : memref<8x16x128xf32, #tpu.memory_space<vmem>>, vector<1x16x128xf32>
    %146 = vector.shape_cast %145 : vector<1x16x128xf32> to vector<16x128xf32>
    %147 = vector.shape_cast %144 : vector<16x128xf32> to vector<1x16x128xf32>
    tpu.vector_store %arg5[%c5, %c0_30, %c0_31], %147 {strides = array<i32>} : memref<8x16x128xf32, #tpu.memory_space<vmem>>, vector<1x16x128xf32>,
    %c8_i32_32 = arith.constant 8 : i32
    %148 = arith.muli %arg1, %c8_i32_32 : i32
    %c6_i32 = arith.constant 6 : i32
    %149 = arith.addi %148, %c6_i32 : i32
    %150 = arith.index_cast %149 : i32 to index
    %151 = memref.load %arg2[%150] : memref<8xf32, #tpu.memory_space<smem>>
    %152 = arith.index_cast %149 : i32 to index
    %153 = memref.load %arg3[%152] : memref<8xf32, #tpu.memory_space<smem>>
    %154 = arith.index_cast %149 : i32 to index
    %155 = memref.load %arg4[%154] : memref<8xf32, #tpu.memory_space<smem>>
    %156 = vector.broadcast %155 : f32 to vector<16x128xf32>
    %157 = arith.subf %3, %156 : vector<16x128xf32>
    %158 = vector.broadcast %153 : f32 to vector<16x128xf32>
    %159 = arith.mulf %157, %158 : vector<16x128xf32>
    %160 = math.absf %159 : vector<16x128xf32>
    %cst_33 = arith.constant 9.99999974E-6 : f32
    %161 = vector.broadcast %cst_33 : f32 to vector<16x128xf32>
    %162 = arith.addf %160, %161 : vector<16x128xf32>
    %163 = math.log %162 : vector<16x128xf32>
    %164 = vector.broadcast %151 : f32 to vector<16x128xf32>
    %165 = arith.mulf %164, %163 : vector<16x128xf32>
    %166 = math.exp %165 : vector<16x128xf32>
    %cst_34 = arith.constant 0.000000e+00 : f32
    %167 = vector.broadcast %cst_34 : f32 to vector<16x128xf32>
    %168 = arith.subf %167, %166 : vector<16x128xf32>
    %c6 = arith.constant 6 : index
    %c0_35 = arith.constant 0 : index
    %c0_36 = arith.constant 0 : index
    %169 = vector.load %arg5[%c6, %c0_35, %c0_36] : memref<8x16x128xf32, #tpu.memory_space<vmem>>, vector<1x16x128xf32>
    %170 = vector.shape_cast %169 : vector<1x16x128xf32> to vector<16x128xf32>
    %171 = vector.shape_cast %168 : vector<16x128xf32> to vector<1x16x128xf32>
    tpu.vector_store %arg5[%c6, %c0_35, %c0_36], %171 {strides = array<i32>} : memref<8x16x128xf32, #tpu.memory_space<vmem>>, vector<1x16x128xf32>,
    %c8_i32_37 = arith.constant 8 : i32
    %172 = arith.muli %arg1, %c8_i32_37 : i32
    %c7_i32 = arith.constant 7 : i32
    %173 = arith.addi %172, %c7_i32 : i32
    %174 = arith.index_cast %173 : i32 to index
    %175 = memref.load %arg2[%174] : memref<8xf32, #tpu.memory_space<smem>>
    %176 = arith.index_cast %173 : i32 to index
    %177 = memref.load %arg3[%176] : memref<8xf32, #tpu.memory_space<smem>>
    %178 = arith.index_cast %173 : i32 to index
    %179 = memref.load %arg4[%178] : memref<8xf32, #tpu.memory_space<smem>>
    %180 = vector.broadcast %179 : f32 to vector<16x128xf32>
    %181 = arith.subf %3, %180 : vector<16x128xf32>
    %182 = vector.broadcast %177 : f32 to vector<16x128xf32>
    %183 = arith.mulf %181, %182 : vector<16x128xf32>
    %184 = math.absf %183 : vector<16x128xf32>
    %cst_38 = arith.constant 9.99999974E-6 : f32
    %185 = vector.broadcast %cst_38 : f32 to vector<16x128xf32>
    %186 = arith.addf %184, %185 : vector<16x128xf32>
    %187 = math.log %186 : vector<16x128xf32>
    %188 = vector.broadcast %175 : f32 to vector<16x128xf32>
    %189 = arith.mulf %188, %187 : vector<16x128xf32>
    %190 = math.exp %189 : vector<16x128xf32>
    %cst_39 = arith.constant 0.000000e+00 : f32
    %191 = vector.broadcast %cst_39 : f32 to vector<16x128xf32>
    %192 = arith.subf %191, %190 : vector<16x128xf32>
    %c7 = arith.constant 7 : index
    %c0_40 = arith.constant 0 : index
    %c0_41 = arith.constant 0 : index
    %193 = vector.load %arg5[%c7, %c0_40, %c0_41] : memref<8x16x128xf32, #tpu.memory_space<vmem>>, vector<1x16x128xf32>
    %194 = vector.shape_cast %193 : vector<1x16x128xf32> to vector<16x128xf32>
    %195 = vector.shape_cast %192 : vector<16x128xf32> to vector<1x16x128xf32>
    tpu.vector_store %arg5[%c7, %c0_40, %c0_41], %195 {strides = array<i32>} : memref<8x16x128xf32, #tpu.memory_space<vmem>>, vector<1x16x128xf32>,
    return
  }
  func.func @transform_0(%arg0: i32, %arg1: i32) -> i32 {
    %c0_i32 = arith.constant 0 : i32
    %c0_i32_0 = arith.constant 0 : i32
    return %c0_i32 : i32
  }
  func.func @transform_1(%arg0: i32, %arg1: i32) -> i32 {
    %c0_i32 = arith.constant 0 : i32
    %c0_i32_0 = arith.constant 0 : i32
    return %c0_i32 : i32
  }
  func.func @transform_2(%arg0: i32, %arg1: i32) -> i32 {
    %c0_i32 = arith.constant 0 : i32
    %c0_i32_0 = arith.constant 0 : i32
    return %c0_i32 : i32
  }
  func.func @transform_3(%arg0: i32, %arg1: i32) -> (i32, i32, i32) {
    %c0_i32 = arith.constant 0 : i32
    %c0_i32_0 = arith.constant 0 : i32
    return %arg1, %arg0, %c0_i32 : i32, i32, i32
  }
}

</mosaic_0001>

<llo_original>
// kernel: attention_prior_pallas.1
$region0: #{attention_prior_pallas.1}
  #allocation0 [shape = 'u32[]', space=smem, size = 0x4, offset = 0x4, fixed_abs, tag = 'smem constant byte address 0x4 - core index']
  #allocation1 [shape = 'u32[144,128]{1,0:T(1,128)}', space=vmem, size = 0x12000, scoped, tag = 'internal scratch']
  #allocation2 [shape = 'f32[16,128]{1,0:T(8,128)}', space=vmem, size = 0x2000, scoped, tag = 'scratch operand']
  %s0 = inlined_call_operand.vmem [shape: f32[8], index: 0, kind: input, shape index: {}]
  %s1 = inlined_call_operand.vmem [shape: f32[8], index: 1, kind: input, shape index: {}]
  %s2 = inlined_call_operand.vmem [shape: f32[8], index: 2, kind: input, shape index: {}]
  %s3 = inlined_call_operand.vmem [shape: f32[8,16,128], index: 3, kind: output, shape index: {}]
  %s4 = sld [smem:[#allocation0]]
  $region38: #{attention_prior_pallas.1} parent=0
    _
  %s6 = ssub.s32 1, %s4
  %s7 = scalar_select 0, %s6, %s4
  $region1: #{attention_prior_pallas.1} parent=0
    #allocation3 [shape = 'u8[512]{0}', space=smem, size = 0x200, scoped, tag = 'input window, operand 0, single buffered']
    #allocation4 [shape = 's32[1]{0}', space=sflag, size = 0x4, scoped, tag = 'scoped memory for attention_prior_pallas.1']
    #allocation5 [shape = 'u8[512]{0}', space=smem, size = 0x200, scoped, tag = 'input window, operand 1, single buffered']
    #allocation6 [shape = 's32[1]{0}', space=sflag, size = 0x4, scoped, tag = 'scoped memory for attention_prior_pallas.1']
    #allocation7 [shape = 'u8[512]{0}', space=smem, size = 0x200, scoped, tag = 'input window, operand 2, single buffered']
    %8 = vsyncpa [#allocation4], 0
    %9 = vsyncpa [#allocation6], 0
    // Predicated region
    $region2: #{attention_prior_pallas.1} parent=1 // pred_check
      _
    $region3: #{attention_prior_pallas.1} parent=1 // pred_check_branch
      %11 = sbr.rel (0) target = $region5
    $region4: #{attention_prior_pallas.1} parent=1 // pred_region
      %s13 = ssub.s32 16, 16
      %14 = vsyncadd [#allocation4], %s13
      %s16 = sshll.u32 %s0, 4
      %s17 = int_to_ptr.vmem [resolvable:$true] %s16
      %19 = dma.vmem_to_smem %s17, 16, [#allocation3], [#allocation4]
    $region5: #{attention_prior_pallas.1} parent=1 // pred_fallthru
      _
    // Predicated region
    $region6: #{attention_prior_pallas.1} parent=1 // pred_check
      _
    $region7: #{attention_prior_pallas.1} parent=1 // pred_check_branch
      %21 = sbr.rel (0) target = $region9
    $region8: #{attention_prior_pallas.1} parent=1 // pred_region
      %s23 = ssub.s32 16, 16
      %24 = vsyncadd [#allocation6], %s23
      %s26 = sshll.u32 %s1, 4
      %s27 = int_to_ptr.vmem [resolvable:$true] %s26
      %29 = dma.vmem_to_smem %s27, 16, [#allocation5], [#allocation6]
    $region9: #{attention_prior_pallas.1} parent=1 // pred_fallthru
      _
    // Predicated region
    $region10: #{attention_prior_pallas.1} parent=1 // pred_check
      _
    $region11: #{attention_prior_pallas.1} parent=1 // pred_check_branch
      %31 = sbr.rel (0) target = $region13
    $region12: #{attention_prior_pallas.1} parent=1 // pred_region
      %s33 = ssub.s32 16, 16
      %34 = vsyncadd [#allocation6], %s33
      %s36 = sshll.u32 %s2, 4
      %s37 = int_to_ptr.vmem [resolvable:$true] %s36
      %39 = dma.vmem_to_smem %s37, 16, [#allocation7], [#allocation6]
    $region13: #{attention_prior_pallas.1} parent=1 // pred_fallthru
      _
    // Predicated region
    $region14: #{attention_prior_pallas.1} parent=1 // pred_check
      _
    $region15: #{attention_prior_pallas.1} parent=1 // pred_check_branch
      %41 = sbr.rel (0) target = $region17
    $region16: #{attention_prior_pallas.1} parent=1 // pred_region
      %42 = dma.done [#allocation4], 16
    $region17: #{attention_prior_pallas.1} parent=1 // pred_fallthru
      _
    // Predicated region
    $region18: #{attention_prior_pallas.1} parent=1 // pred_check
      _
    $region19: #{attention_prior_pallas.1} parent=1 // pred_check_branch
      %44 = sbr.rel (0) target = $region21
    $region20: #{attention_prior_pallas.1} parent=1 // pred_region
      %45 = dma.done [#allocation6], 16
    $region21: #{attention_prior_pallas.1} parent=1 // pred_fallthru
      _
    // Predicated region
    $region22: #{attention_prior_pallas.1} parent=1 // pred_check
      _
    $region23: #{attention_prior_pallas.1} parent=1 // pred_check_branch
      %47 = sbr.rel (0) target = $region25
    $region24: #{attention_prior_pallas.1} parent=1 // pred_region
      %48 = dma.done [#allocation6], 16
    $region25: #{attention_prior_pallas.1} parent=1 // pred_fallthru
      _
    %49 = sfence
    %p50 = scmp.eq.s32.totalorder 0, 0
    // Predicated region
    $region26: #{attention_prior_pallas.1} parent=1 // pred_check
      %p51 = pneg %p50
    $region27: #{attention_prior_pallas.1} parent=1 // pred_check_branch
      %53 = sbr.rel (%p51) target = $region29
    $region28: #{attention_prior_pallas.1} parent=1 // pred_region
      %v54 = vlaneseq
      %v55 = vshrl.u32 %v54, 7
      %v56 = vadd.s32 %v55, 8
      %v57 = vlaneseq
      %v58 = vand.u32 %v57, 127
      %s59 = smul.u32 0, 16
      %s60 = scvt.s32.f32 %s59
      %v61 = vsub.s32 %v58, %v55
      %v62 = vsub.s32 %v58, %v56
      %v63 = vcvt.s32.f32 %v61
      %v64 = vcvt.s32.f32 %v62
      %v65 = vstv %s60
      %v66 = vsub.f32 %v63, %v65
      %v67 = vsub.f32 %v64, %v65
      %68 = vst [vmem:[#allocation2] sm:$0xff] %v66
      %69 = vst [vmem:[#allocation2 + $0x8] sm:$0xff] %v67
    $region29: #{attention_prior_pallas.1} parent=1 // pred_fallthru
      _
    %v70 = vld [vmem:[#allocation2] sm:$0xff]
    %v71 = vld [vmem:[#allocation2 + $0x8] sm:$0xff]
    %s72 = smul.u32 0, 8
    %s73 = sld [smem:[#allocation3 + %s72]]
    %s74 = sld [smem:[#allocation5 + %s72]]
    %s75 = sld [smem:[#allocation7 + %s72]]
    %v76 = vstv %s75
    %v77 = vsub.f32 %v70, %v76
    %v78 = vsub.f32 %v71, %v76
    %v79 = vstv %s74
    %v80 = vmul.f32 %v77, %v79
    %v81 = vmul.f32 %v78, %v79
    %v82 = vand.u32 2147483647, %v80
    %v83 = vand.u32 2147483647, %v81
    %v84 = vadd.f32 %v82, 1e-05
    %v85 = vadd.f32 %v83, 1e-05
    %v86 = vlog2.pop %v84
    %v87 = vmul.f32 %v86, 0.6931472
    %v88 = vlog2.pop %v85
    %v89 = vmul.f32 %v88, 0.6931472
    %v90 = vstv %s73
    %v91 = vmul.f32 %v90, %v87
    %v92 = vmul.f32 %v90, %v89
    %v93 = vmul.f32 %v91, 1.442695
    %v94 = vpow.pop %v93
    %v95 = vmul.f32 %v92, 1.442695
    %v96 = vpow.pop %v95
    %v97 = vsub.f32 0.0, %v94
    %v98 = vsub.f32 0.0, %v96
    %99 = vst [vmem:[%s3] sm:$0xff] %v97
    %100 = vst [vmem:[%s3 + $0x8] sm:$0xff] %v98
    %s101 = sadd.s32 %s72, 1
    %s102 = sld [smem:[#allocation3 + %s101]]
    %s103 = sld [smem:[#allocation5 + %s101]]
    %s104 = sld [smem:[#allocation7 + %s101]]
    %v105 = vstv %s104
    %v106 = vsub.f32 %v70, %v105
    %v107 = vsub.f32 %v71, %v105
    %v108 = vstv %s103
    %v109 = vmul.f32 %v106, %v108
    %v110 = vmul.f32 %v107, %v108
    %v111 = vand.u32 2147483647, %v109
    %v112 = vand.u32 2147483647, %v110
    %v113 = vadd.f32 %v111, 1e-05
    %v114 = vadd.f32 %v112, 1e-05
    %v115 = vlog2.pop %v113
    %v116 = vmul.f32 %v115, 0.6931472
    %v117 = vlog2.pop %v114
    %v118 = vmul.f32 %v117, 0.6931472
    %v119 = vstv %s102
    %v120 = vmul.f32 %v119, %v116
    %v121 = vmul.f32 %v119, %v118
    %v122 = vmul.f32 %v120, 1.442695
    %v123 = vpow.pop %v122
    %v124 = vmul.f32 %v121, 1.442695
    %v125 = vpow.pop %v124
    %v126 = vsub.f32 0.0, %v123
    %v127 = vsub.f32 0.0, %v125
    %s128 = scalar_lea.vmem %s3, 16
    %129 = vst [vmem:[%s128] sm:$0xff] %v126
    %130 = vst [vmem:[%s128 + $0x8] sm:$0xff] %v127
    %s131 = sadd.s32 %s72, 2
    %s132 = sld [smem:[#allocation3 + %s131]]
    %s133 = sld [smem:[#allocation5 + %s131]]
    %s134 = sld [smem:[#allocation7 + %s131]]
    %v135 = vstv %s134
    %v136 = vsub.f32 %v70, %v135
    %v137 = vsub.f32 %v71, %v135
    %v138 = vstv %s133
    %v139 = vmul.f32 %v136, %v138
    %v140 = vmul.f32 %v137, %v138
    %v141 = vand.u32 2147483647, %v139
    %v142 = vand.u32 2147483647, %v140
    %v143 = vadd.f32 %v141, 1e-05
    %v144 = vadd.f32 %v142, 1e-05
    %v145 = vlog2.pop %v143
    %v146 = vmul.f32 %v145, 0.6931472
    %v147 = vlog2.pop %v144
    %v148 = vmul.f32 %v147, 0.6931472
    %v149 = vstv %s132
    %v150 = vmul.f32 %v149, %v146
    %v151 = vmul.f32 %v149, %v148
    %v152 = vmul.f32 %v150, 1.442695
    %v153 = vpow.pop %v152
    %v154 = vmul.f32 %v151, 1.442695
    %v155 = vpow.pop %v154
    %v156 = vsub.f32 0.0, %v153
    %v157 = vsub.f32 0.0, %v155
    %s158 = scalar_lea.vmem %s3, 32
    %159 = vst [vmem:[%s158] sm:$0xff] %v156
    %160 = vst [vmem:[%s158 + $0x8] sm:$0xff] %v157
    %s161 = sadd.s32 %s72, 3
    %s162 = sld [smem:[#allocation3 + %s161]]
    %s163 = sld [smem:[#allocation5 + %s161]]
    %s164 = sld [smem:[#allocation7 + %s161]]
    %v165 = vstv %s164
    %v166 = vsub.f32 %v70, %v165
    %v167 = vsub.f32 %v71, %v165
    %v168 = vstv %s163
    %v169 = vmul.f32 %v166, %v168
    %v170 = vmul.f32 %v167, %v168
    %v171 = vand.u32 2147483647, %v169
    %v172 = vand.u32 2147483647, %v170
    %v173 = vadd.f32 %v171, 1e-05
    %v174 = vadd.f32 %v172, 1e-05
    %v175 = vlog2.pop %v173
    %v176 = vmul.f32 %v175, 0.6931472
    %v177 = vlog2.pop %v174
    %v178 = vmul.f32 %v177, 0.6931472
    %v179 = vstv %s162
    %v180 = vmul.f32 %v179, %v176
    %v181 = vmul.f32 %v179, %v178
    %v182 = vmul.f32 %v180, 1.442695
    %v183 = vpow.pop %v182
    %v184 = vmul.f32 %v181, 1.442695
    %v185 = vpow.pop %v184
    %v186 = vsub.f32 0.0, %v183
    %v187 = vsub.f32 0.0, %v185
    %s188 = scalar_lea.vmem %s3, 48
    %189 = vst [vmem:[%s188] sm:$0xff] %v186
    %190 = vst [vmem:[%s188 + $0x8] sm:$0xff] %v187
    %s191 = sadd.s32 %s72, 4
    %s192 = sld [smem:[#allocation3 + %s191]]
    %s193 = sld [smem:[#allocation5 + %s191]]
    %s194 = sld [smem:[#allocation7 + %s191]]
    %v195 = vstv %s194
    %v196 = vsub.f32 %v70, %v195
    %v197 = vsub.f32 %v71, %v195
    %v198 = vstv %s193
    %v199 = vmul.f32 %v196, %v198
    %v200 = vmul.f32 %v197, %v198
    %v201 = vand.u32 2147483647, %v199
    %v202 = vand.u32 2147483647, %v200
    %v203 = vadd.f32 %v201, 1e-05
    %v204 = vadd.f32 %v202, 1e-05
    %v205 = vlog2.pop %v203
    %v206 = vmul.f32 %v205, 0.6931472
    %v207 = vlog2.pop %v204
    %v208 = vmul.f32 %v207, 0.6931472
    %v209 = vstv %s192
    %v210 = vmul.f32 %v209, %v206
    %v211 = vmul.f32 %v209, %v208
    %v212 = vmul.f32 %v210, 1.442695
    %v213 = vpow.pop %v212
    %v214 = vmul.f32 %v211, 1.442695
    %v215 = vpow.pop %v214
    %v216 = vsub.f32 0.0, %v213
    %v217 = vsub.f32 0.0, %v215
    %s218 = scalar_lea.vmem %s3, 64
    %219 = vst [vmem:[%s218] sm:$0xff] %v216
    %220 = vst [vmem:[%s218 + $0x8] sm:$0xff] %v217
    %s221 = sadd.s32 %s72, 5
    %s222 = sld [smem:[#allocation3 + %s221]]
    %s223 = sld [smem:[#allocation5 + %s221]]
    %s224 = sld [smem:[#allocation7 + %s221]]
    %v225 = vstv %s224
    %v226 = vsub.f32 %v70, %v225
    %v227 = vsub.f32 %v71, %v225
    %v228 = vstv %s223
    %v229 = vmul.f32 %v226, %v228
    %v230 = vmul.f32 %v227, %v228
    %v231 = vand.u32 2147483647, %v229
    %v232 = vand.u32 2147483647, %v230
    %v233 = vadd.f32 %v231, 1e-05
    %v234 = vadd.f32 %v232, 1e-05
    %v235 = vlog2.pop %v233
    %v236 = vmul.f32 %v235, 0.6931472
    %v237 = vlog2.pop %v234
    %v238 = vmul.f32 %v237, 0.6931472
    %v239 = vstv %s222
    %v240 = vmul.f32 %v239, %v236
    %v241 = vmul.f32 %v239, %v238
    %v242 = vmul.f32 %v240, 1.442695
    %v243 = vpow.pop %v242
    %v244 = vmul.f32 %v241, 1.442695
    %v245 = vpow.pop %v244
    %v246 = vsub.f32 0.0, %v243
    %v247 = vsub.f32 0.0, %v245
    %s248 = scalar_lea.vmem %s3, 80
    %249 = vst [vmem:[%s248] sm:$0xff] %v246
    %250 = vst [vmem:[%s248 + $0x8] sm:$0xff] %v247
    %s251 = sadd.s32 %s72, 6
    %s252 = sld [smem:[#allocation3 + %s251]]
    %s253 = sld [smem:[#allocation5 + %s251]]
    %s254 = sld [smem:[#allocation7 + %s251]]
    %v255 = vstv %s254
    %v256 = vsub.f32 %v70, %v255
    %v257 = vsub.f32 %v71, %v255
    %v258 = vstv %s253
    %v259 = vmul.f32 %v256, %v258
    %v260 = vmul.f32 %v257, %v258
    %v261 = vand.u32 2147483647, %v259
    %v262 = vand.u32 2147483647, %v260
    %v263 = vadd.f32 %v261, 1e-05
    %v264 = vadd.f32 %v262, 1e-05
    %v265 = vlog2.pop %v263
    %v266 = vmul.f32 %v265, 0.6931472
    %v267 = vlog2.pop %v264
    %v268 = vmul.f32 %v267, 0.6931472
    %v269 = vstv %s252
    %v270 = vmul.f32 %v269, %v266
    %v271 = vmul.f32 %v269, %v268
    %v272 = vmul.f32 %v270, 1.442695
    %v273 = vpow.pop %v272
    %v274 = vmul.f32 %v271, 1.442695
    %v275 = vpow.pop %v274
    %v276 = vsub.f32 0.0, %v273
    %v277 = vsub.f32 0.0, %v275
    %s278 = scalar_lea.vmem %s3, 96
    %279 = vst [vmem:[%s278] sm:$0xff] %v276
    %280 = vst [vmem:[%s278 + $0x8] sm:$0xff] %v277
    %s281 = sadd.s32 %s72, 7
    %s282 = sld [smem:[#allocation3 + %s281]]
    %s283 = sld [smem:[#allocation5 + %s281]]
    %s284 = sld [smem:[#allocation7 + %s281]]
    %v285 = vstv %s284
    %v286 = vsub.f32 %v70, %v285
    %v287 = vsub.f32 %v71, %v285
    %v288 = vstv %s283
    %v289 = vmul.f32 %v286, %v288
    %v290 = vmul.f32 %v287, %v288
    %v291 = vand.u32 2147483647, %v289
    %v292 = vand.u32 2147483647, %v290
    %v293 = vadd.f32 %v291, 1e-05
    %v294 = vadd.f32 %v292, 1e-05
    %v295 = vlog2.pop %v293
    %v296 = vmul.f32 %v295, 0.6931472
    %v297 = vlog2.pop %v294
    %v298 = vmul.f32 %v297, 0.6931472
    %v299 = vstv %s282
    %v300 = vmul.f32 %v299, %v296
    %v301 = vmul.f32 %v299, %v298
    %v302 = vmul.f32 %v300, 1.442695
    %v303 = vpow.pop %v302
    %v304 = vmul.f32 %v301, 1.442695
    %v305 = vpow.pop %v304
    %v306 = vsub.f32 0.0, %v303
    %v307 = vsub.f32 0.0, %v305
    %s308 = scalar_lea.vmem %s3, 112
    %309 = vst [vmem:[%s308] sm:$0xff] %v306
    %310 = vst [vmem:[%s308 + $0x8] sm:$0xff] %v307
    // Predicated region
    $region30: #{attention_prior_pallas.1} parent=1 // pred_check
      _
    $region31: #{attention_prior_pallas.1} parent=1 // pred_check_branch
      %312 = sbr.rel (0) target = $region33
    $region32: #{attention_prior_pallas.1} parent=1 // pred_region
      _
    $region33: #{attention_prior_pallas.1} parent=1 // pred_fallthru
      _
    // Predicated region
    $region34: #{attention_prior_pallas.1} parent=1 // pred_check
      _
    $region35: #{attention_prior_pallas.1} parent=1 // pred_check_branch
      %314 = sbr.rel (0) target = $region37
    $region36: #{attention_prior_pallas.1} parent=1 // pred_region
      _
    $region37: #{attention_prior_pallas.1} parent=1 // pred_fallthru
      _
    %315 = vsyncpa [#allocation4], 1
    %316 = vsyncpa [#allocation6], 1

</llo_original>
